<compile_context>
chip_gen: v6e
topology: v6e:2x2x1
jax: 0.10.0
libtpu: 0.0.40
codegen_flags: <defaults>
</compile_context>

<pallas_src>
import jax
import jax.numpy as jnp
from jax.experimental import pallas as pl
from jax.experimental.pallas import tpu as pltpu

LN_EPS = 1e-5


def ffn_kernel(x_ref, w1_ref, b1_ref, w2_ref, b2_ref, o_ref, sum_ref, sumsq_ref):
    # x_ref : (1, tS, D)  input tile for one batch element
    # w1_ref: (D, F) bf16,  b1_ref: (1, F) f32
    # w2_ref: (F, D) bf16,  b2_ref: (1, D) f32
    # o_ref : (1, S, D)     full output slab for this batch element (resident)
    # sum_ref / sumsq_ref : (1, D) f32 running LayerNorm partial sums
    s = pl.program_id(1)
    n_s = pl.num_programs(1)
    t_s = x_ref.shape[1]

    @pl.when(s == 0)
    def _():
        sum_ref[...] = jnp.zeros_like(sum_ref)
        sumsq_ref[...] = jnp.zeros_like(sumsq_ref)

    x_f32 = x_ref[0].astype(jnp.float32)        # residual kept in f32
    x_bf16 = x_f32.astype(jnp.bfloat16)         # MXU operand

    # linear1 (bf16 MXU, f32 accumulate); bias + cast + ReLU fused in one pass.
    h = jnp.dot(x_bf16, w1_ref[...], preferred_element_type=jnp.float32)
    # ReLU on the bf16 value is bit-identical to relu-then-cast and halves the
    # VALU traffic over the (tS, F) hidden on v6e/v7x (compiler widens on v5e).
    h_bf16 = jnp.maximum((h + b1_ref[...]).astype(jnp.bfloat16), 0.0)

    # linear2 + residual (bf16 MXU, f32 accumulate; bias/residual add in f32).
    y = jnp.dot(h_bf16, w2_ref[...], preferred_element_type=jnp.float32)
    y = y + b2_ref[...] + x_f32                 # (tS, D) f32, un-normalized

    # Store the un-normalized tile straight into the resident output slab.
    start = pl.multiple_of(s * t_s, t_s)
    o_ref[0, pl.ds(start, t_s), :] = y.astype(o_ref.dtype)

    # Running LayerNorm statistics (sublane reduce -> XLU, hidden under MXU).
    sum_ref[...] += jnp.sum(y, axis=0, keepdims=True)
    sumsq_ref[...] += jnp.sum(y * y, axis=0, keepdims=True)

    # One fused normalize pass over the resident slab at the last seq tile.
    @pl.when(s == n_s - 1)
    def _():
        inv_n = 1.0 / (o_ref.shape[1] * o_ref.shape[2])       # static
        mean = jnp.sum(sum_ref[...]) * inv_n
        ex2 = jnp.sum(sumsq_ref[...]) * inv_n
        var = jnp.maximum(ex2 - mean * mean, 0.0)              # E[y^2]-mean^2
        inv_std = jax.lax.rsqrt(var + LN_EPS)
        y_all = o_ref[0].astype(jnp.float32)
        o_ref[0] = ((y_all - mean) * inv_std).astype(o_ref.dtype)


def _pick_seq_tile(S, block_s):
    """Largest divisor of S that is <= block_s and a multiple of 8 (else S)."""
    cap = min(block_s, S)
    for d in range(cap, 0, -1):
        if S % d == 0 and (d == S or d % 8 == 0):
            return d
    return S


def _vmem_limit_bytes(t_s, S, D, F, out_itemsize):
    est = (
        2 * t_s * D * 4              # x tiles (f32, double-buffered)
        + (D * F + F * D) * 2        # bf16 weights (single-buffered)
        + (F + D) * 4                # biases (single-buffered)
        + 2 * S * D * out_itemsize   # resident output slab (double-buffered)
        + 2 * D * 4                  # LayerNorm running-sum scratch
        + t_s * F * (4 + 2)          # transient (tS, F) hidden (f32 + bf16)
    )
    limit = int(1.2 * est) + (4 << 20)
    try:
        cap = pltpu.get_tpu_info().vmem_capacity_bytes
    except Exception:
        cap = 128 << 20              # conservative fallback
    return max(min(limit, int(0.85 * cap)), 16 << 20)


def position_wise_ffn(x, w1, b1, w2, b2, *, block_s=512):
    """y = relu(x @ w1 + b1) @ w2 + b2 + x ; layer_norm over (S, D) per batch.

    x : (B, S, D) float32
    w1: (D, F), b1: (1, F) or (F,), w2: (F, D), b2: (1, D) or (D,)
    (weights stored as (in, out) so x @ W matches nn.Linear's x @ W^T).
    """
    B, S, D = x.shape
    F = w1.shape[1]
    t_s = _pick_seq_tile(S, block_s)

    # bf16 weights: MXU-native dtype, halves weight VMEM / DMA traffic.
    w1_bf = w1.astype(jnp.bfloat16)
    w2_bf = w2.astype(jnp.bfloat16)
    b1_f = jnp.reshape(b1, (1, F)).astype(jnp.float32)
    b2_f = jnp.reshape(b2, (1, D)).astype(jnp.float32)

    # Constant-index operands never change -> one pipeline buffer is enough.
    const = dict(pipeline_mode=pl.Buffered(1))

    return pl.pallas_call(
        ffn_kernel,
        out_shape=jax.ShapeDtypeStruct((B, S, D), x.dtype),
        grid=(B, S // t_s),
        in_specs=[
            pl.BlockSpec((1, t_s, D), lambda b, s: (b, s, 0)),    # x
            pl.BlockSpec((D, F), lambda b, s: (0, 0), **const),   # w1 (bf16)
            pl.BlockSpec((1, F), lambda b, s: (0, 0), **const),   # b1 (f32)
            pl.BlockSpec((F, D), lambda b, s: (0, 0), **const),   # w2 (bf16)
            pl.BlockSpec((1, D), lambda b, s: (0, 0), **const),   # b2 (f32)
        ],
        out_specs=pl.BlockSpec((1, S, D), lambda b, s: (b, 0, 0)),
        scratch_shapes=[
            pltpu.VMEM((1, D), jnp.float32),   # running sum(y)
            pltpu.VMEM((1, D), jnp.float32),   # running sum(y*y)
        ],
        compiler_params=pltpu.CompilerParams(
            dimension_semantics=("parallel", "arbitrary"),
            vmem_limit_bytes=_vmem_limit_bytes(t_s, S, D, F, x.dtype.itemsize),
        ),
    )(x, w1_bf, b1_f, w2_bf, b2_f)


def reference_bf16(x, w1, b1, w2, b2):
    # Mirrors the kernel numerics: bf16 matmul operands, f32 accumulation,
    # f32 bias / ReLU / residual / LayerNorm.
    bf = lambda a: a.astype(jnp.bfloat16).astype(jnp.float32)
    h = jnp.maximum(bf(x) @ bf(w1) + b1, 0.0)
    y = bf(h) @ bf(w2) + b2 + x
    mean = jnp.mean(y, axis=(1, 2), keepdims=True)
    var = jnp.mean((y - mean) ** 2, axis=(1, 2), keepdims=True)
    return (y - mean) / jnp.sqrt(var + LN_EPS)


def reference_f32(x, w1, b1, w2, b2):
    # Exact module semantics in f32 (looser sanity check).
    h = jnp.maximum(x @ w1 + b1, 0.0)
    y = h @ w2 + b2 + x
    mean = jnp.mean(y, axis=(1, 2), keepdims=True)
    var = jnp.mean((y - mean) ** 2, axis=(1, 2), keepdims=True)
    return (y - mean) / jnp.sqrt(var + LN_EPS)


if __name__ == "__main__":
    # Small but TPU-friendly shapes: d_model is a multiple of 128 (lane-dense
    # stores); block_s=128 splits S=256 into two seq tiles so the running-sum
    # LayerNorm accumulation path is exercised (production default is 512).
    B, S, d_model, d_ffn = 2, 256, 128, 256

    key = jax.random.PRNGKey(0)
    kx, k1, k2, k3, k4 = jax.random.split(key, 5)

    x = jax.random.normal(kx, (B, S, d_model), dtype=jnp.float32)
    w1 = jax.random.normal(k1, (d_model, d_ffn), dtype=jnp.float32) * 0.1
    b1 = jax.random.normal(k2, (1, d_ffn), dtype=jnp.float32) * 0.1
    w2 = jax.random.normal(k3, (d_ffn, d_model), dtype=jnp.float32) * 0.1
    b2 = jax.random.normal(k4, (1, d_model), dtype=jnp.float32) * 0.1

    out = position_wise_ffn(x, w1, b1, w2, b2, block_s=128)
    out = jax.block_until_ready(out)
    assert out.shape == (B, S, d_model)

    ref_bf = reference_bf16(x, w1, b1, w2, b2)
    ref_fp = reference_f32(x, w1, b1, w2, b2)
    err_bf = float(jnp.max(jnp.abs(out - ref_bf)))
    err_fp = float(jnp.max(jnp.abs(out - ref_fp)))
    assert jnp.allclose(out, ref_bf, atol=2e-2, rtol=2e-2), (
        f"mismatch vs bf16-emulating reference: max abs diff {err_bf:.3e}")
    assert jnp.allclose(out, ref_fp, atol=6e-2, rtol=6e-2), (
        f"mismatch vs f32 module reference: max abs diff {err_fp:.3e}")
    print("KERNEL_OK")
</pallas_src>

<mosaic_0001>
module attributes {stable_mosaic.version = 11 : i64} {
  func.func @ffn_kernel(%arg0: i32, %arg1: i32, %arg2: memref<1x128x128xf32, #tpu.memory_space<vmem>>, %arg3: memref<128x256xbf16, #tpu.memory_space<vmem>>, %arg4: memref<1x256xf32, #tpu.memory_space<vmem>>, %arg5: memref<256x128xbf16, #tpu.memory_space<vmem>>, %arg6: memref<1x128xf32, #tpu.memory_space<vmem>>, %arg7: memref<1x256x128xf32, #tpu.memory_space<vmem>>, %arg8: memref<1x128xf32, #tpu.memory_space<vmem>>, %arg9: memref<1x128xf32, #tpu.memory_space<vmem>>) attributes {dimension_semantics = [#tpu.dimension_semantics<parallel>, #tpu.dimension_semantics<arbitrary>], iteration_bounds = array<i64: 2, 2>, scalar_prefetch = 0 : i64, scratch_operands = 2 : i64, tpu.core_type = #tpu.core_type<tc>, window_params = [{transform_indices = @transform_0, window_bounds = array<i64: 1, 128, 128>}, {pipeline_mode = #tpu.pipeline_mode<synchronous>, transform_indices = @transform_1, window_bounds = array<i64: 128, 256>}, {pipeline_mode = #tpu.pipeline_mode<synchronous>, transform_indices = @transform_2, window_bounds = array<i64: 1, 256>}, {pipeline_mode = #tpu.pipeline_mode<synchronous>, transform_indices = @transform_3, window_bounds = array<i64: 256, 128>}, {pipeline_mode = #tpu.pipeline_mode<synchronous>, transform_indices = @transform_4, window_bounds = array<i64: 1, 128>}, {transform_indices = @transform_5, window_bounds = array<i64: 1, 256, 128>}]} {
    %c0_i32 = arith.constant 0 : i32
    %0 = arith.cmpi eq, %arg1, %c0_i32 : i32
    %1 = arith.extui %0 : i1 to i32
    %c0_i32_0 = arith.constant 0 : i32
    %2 = arith.cmpi ne, %1, %c0_i32_0 : i32
    scf.if %2 {
      %cst_26 = arith.constant 0.000000e+00 : f32
      %40 = vector.broadcast %cst_26 : f32 to vector<1x128xf32>
      %c0_27 = arith.constant 0 : index
      %c0_28 = arith.constant 0 : index
      %41 = vector.load %arg8[%c0_27, %c0_28] : memref<1x128xf32, #tpu.memory_space<vmem>>, vector<1x128xf32>
      tpu.vector_store %arg8[%c0_27, %c0_28], %40 {strides = array<i32>} : memref<1x128xf32, #tpu.memory_space<vmem>>, vector<1x128xf32>,
      %cst_29 = arith.constant 0.000000e+00 : f32
      %42 = vector.broadcast %cst_29 : f32 to vector<1x128xf32>
      %c0_30 = arith.constant 0 : index
      %c0_31 = arith.constant 0 : index
      %43 = vector.load %arg9[%c0_30, %c0_31] : memref<1x128xf32, #tpu.memory_space<vmem>>, vector<1x128xf32>
      tpu.vector_store %arg9[%c0_30, %c0_31], %42 {strides = array<i32>} : memref<1x128xf32, #tpu.memory_space<vmem>>, vector<1x128xf32>,
    } else {
    }
    %c0 = arith.constant 0 : index
    %c0_1 = arith.constant 0 : index
    %c0_2 = arith.constant 0 : index
    %3 = vector.load %arg2[%c0, %c0_1, %c0_2] : memref<1x128x128xf32, #tpu.memory_space<vmem>>, vector<1x128x128xf32>
    %4 = vector.shape_cast %3 : vector<1x128x128xf32> to vector<128x128xf32>
    %5 = arith.truncf %4 : vector<128x128xf32> to vector<128x128xbf16>
    %c0_3 = arith.constant 0 : index
    %c0_4 = arith.constant 0 : index
    %6 = vector.load %arg3[%c0_3, %c0_4] : memref<128x256xbf16, #tpu.memory_space<vmem>>, vector<128x256xbf16>
    %cst = arith.constant dense<0.000000e+00> : vector<128x256xf32>
    %7 = tpu.matmul %5, %6, %cst {dimension_numbers = #tpu.dot_dimension_numbers<[1], [0], [0], [1], [0, 0, 1, 1], [], []>} : vector<128x128xbf16>, vector<128x256xbf16>, vector<128x256xf32> -> vector<128x256xf32>
    %c0_5 = arith.constant 0 : index
    %c0_6 = arith.constant 0 : index
    %8 = vector.load %arg4[%c0_5, %c0_6] : memref<1x256xf32, #tpu.memory_space<vmem>>, vector<1x256xf32>
    %9 = vector.broadcast %8 : vector<1x256xf32> to vector<128x256xf32>
    %10 = arith.addf %7, %9 : vector<128x256xf32>
    %11 = arith.truncf %10 : vector<128x256xf32> to vector<128x256xbf16>
    %cst_7 = arith.constant 0.000000e+00 : bf16
    %12 = vector.broadcast %cst_7 : bf16 to vector<128x256xbf16>
    %13 = arith.maximumf %11, %12 : vector<128x256xbf16>
    %c0_8 = arith.constant 0 : index
    %c0_9 = arith.constant 0 : index
    %14 = vector.load %arg5[%c0_8, %c0_9] : memref<256x128xbf16, #tpu.memory_space<vmem>>, vector<256x128xbf16>
    %cst_10 = arith.constant dense<0.000000e+00> : vector<128x128xf32>
    %15 = tpu.matmul %13, %14, %cst_10 {dimension_numbers = #tpu.dot_dimension_numbers<[1], [0], [0], [1], [0, 0, 1, 1], [], []>} : vector<128x256xbf16>, vector<256x128xbf16>, vector<128x128xf32> -> vector<128x128xf32>
    %c0_11 = arith.constant 0 : index
    %c0_12 = arith.constant 0 : index
    %16 = vector.load %arg6[%c0_11, %c0_12] : memref<1x128xf32, #tpu.memory_space<vmem>>, vector<1x128xf32>
    %17 = vector.broadcast %16 : vector<1x128xf32> to vector<128x128xf32>
    %18 = arith.addf %15, %17 : vector<128x128xf32>
    %19 = arith.addf %18, %4 : vector<128x128xf32>
    %c128_i32 = arith.constant 128 : i32
    %20 = arith.muli %arg1, %c128_i32 : i32
    %21 = tpu.assume_multiple %20, 128 : i32
    %c0_13 = arith.constant 0 : index
    %22 = arith.index_cast %21 : i32 to index
    %c0_14 = arith.constant 0 : index
    %23 = vector.load %arg7[%c0_13, %22, %c0_14] : memref<1x256x128xf32, #tpu.memory_space<vmem>>, vector<1x128x128xf32>
    %24 = vector.shape_cast %23 : vector<1x128x128xf32> to vector<128x128xf32>
    %25 = vector.shape_cast %19 : vector<128x128xf32> to vector<1x128x128xf32>
    tpu.vector_store %arg7[%c0_13, %22, %c0_14], %25 {strides = array<i32>} : memref<1x256x128xf32, #tpu.memory_space<vmem>>, vector<1x128x128xf32>,
    %c0_15 = arith.constant 0 : index
    %c0_16 = arith.constant 0 : index
    %26 = vector.load %arg8[%c0_15, %c0_16] : memref<1x128xf32, #tpu.memory_space<vmem>>, vector<1x128xf32>
    %cst_17 = arith.constant dense<0.000000e+00> : vector<128xf32>
    %27 = vector.multi_reduction <add>, %19, %cst_17 [0] : vector<128x128xf32> to vector<128xf32>
    %28 = vector.shape_cast %27 : vector<128xf32> to vector<1x128xf32>
    %29 = arith.addf %26, %28 : vector<1x128xf32>
    %c0_18 = arith.constant 0 : index
    %c0_19 = arith.constant 0 : index
    %30 = vector.load %arg8[%c0_18, %c0_19] : memref<1x128xf32, #tpu.memory_space<vmem>>, vector<1x128xf32>
    tpu.vector_store %arg8[%c0_18, %c0_19], %29 {strides = array<i32>} : memref<1x128xf32, #tpu.memory_space<vmem>>, vector<1x128xf32>,
    %c0_20 = arith.constant 0 : index
    %c0_21 = arith.constant 0 : index
    %31 = vector.load %arg9[%c0_20, %c0_21] : memref<1x128xf32, #tpu.memory_space<vmem>>, vector<1x128xf32>
    %32 = arith.mulf %19, %19 : vector<128x128xf32>
    %cst_22 = arith.constant dense<0.000000e+00> : vector<128xf32>
    %33 = vector.multi_reduction <add>, %32, %cst_22 [0] : vector<128x128xf32> to vector<128xf32>
    %34 = vector.shape_cast %33 : vector<128xf32> to vector<1x128xf32>
    %35 = arith.addf %31, %34 : vector<1x128xf32>
    %c0_23 = arith.constant 0 : index
    %c0_24 = arith.constant 0 : index
    %36 = vector.load %arg9[%c0_23, %c0_24] : memref<1x128xf32, #tpu.memory_space<vmem>>, vector<1x128xf32>
    tpu.vector_store %arg9[%c0_23, %c0_24], %35 {strides = array<i32>} : memref<1x128xf32, #tpu.memory_space<vmem>>, vector<1x128xf32>,
    %c1_i32 = arith.constant 1 : i32
    %37 = arith.cmpi eq, %arg1, %c1_i32 : i32
    %38 = arith.extui %37 : i1 to i32
    %c0_i32_25 = arith.constant 0 : i32
    %39 = arith.cmpi ne, %38, %c0_i32_25 : i32
    scf.if %39 {
      %c0_26 = arith.constant 0 : index
      %c0_27 = arith.constant 0 : index
      %40 = vector.load %arg8[%c0_26, %c0_27] : memref<1x128xf32, #tpu.memory_space<vmem>>, vector<1x128xf32>
      %41 = vector.shape_cast %40 : vector<1x128xf32> to vector<1x1x128xf32>
      %cst_28 = arith.constant dense<0.000000e+00> : vector<1xf32>
      %42 = vector.multi_reduction <add>, %41, %cst_28 [1, 2] : vector<1x1x128xf32> to vector<1xf32>
      %43 = vector.shape_cast %42 : vector<1xf32> to vector<1x1x1xf32>
      %44 = vector.extract %43[0, 0, 0] : f32 from vector<1x1x1xf32>
      %cst_29 = arith.constant 3.05175781E-5 : f32
      %45 = arith.mulf %44, %cst_29 : f32
      %c0_30 = arith.constant 0 : index
      %c0_31 = arith.constant 0 : index
      %46 = vector.load %arg9[%c0_30, %c0_31] : memref<1x128xf32, #tpu.memory_space<vmem>>, vector<1x128xf32>
      %47 = vector.shape_cast %46 : vector<1x128xf32> to vector<1x1x128xf32>
      %cst_32 = arith.constant dense<0.000000e+00> : vector<1xf32>
      %48 = vector.multi_reduction <add>, %47, %cst_32 [1, 2] : vector<1x1x128xf32> to vector<1xf32>
      %49 = vector.shape_cast %48 : vector<1xf32> to vector<1x1x1xf32>
      %50 = vector.extract %49[0, 0, 0] : f32 from vector<1x1x1xf32>
      %cst_33 = arith.constant 3.05175781E-5 : f32
      %51 = arith.mulf %50, %cst_33 : f32
      %52 = arith.mulf %45, %45 : f32
      %53 = arith.subf %51, %52 : f32
      %cst_34 = arith.constant 0.000000e+00 : f32
      %54 = arith.maximumf %53, %cst_34 : f32
      %cst_35 = arith.constant 9.99999974E-6 : f32
      %55 = arith.addf %54, %cst_35 : f32
      %56 = math.rsqrt %55 : f32
      %c0_36 = arith.constant 0 : index
      %c0_37 = arith.constant 0 : index
      %c0_38 = arith.constant 0 : index
      %57 = vector.load %arg7[%c0_36, %c0_37, %c0_38] : memref<1x256x128xf32, #tpu.memory_space<vmem>>, vector<1x256x128xf32>
      %58 = vector.shape_cast %57 : vector<1x256x128xf32> to vector<256x128xf32>
      %59 = vector.broadcast %45 : f32 to vector<256x128xf32>
      %60 = arith.subf %58, %59 : vector<256x128xf32>
      %61 = vector.broadcast %56 : f32 to vector<256x128xf32>
      %62 = arith.mulf %60, %61 : vector<256x128xf32>
      %c0_39 = arith.constant 0 : index
      %c0_40 = arith.constant 0 : index
      %c0_41 = arith.constant 0 : index
      %63 = vector.load %arg7[%c0_39, %c0_40, %c0_41] : memref<1x256x128xf32, #tpu.memory_space<vmem>>, vector<1x256x128xf32>
      %64 = vector.shape_cast %63 : vector<1x256x128xf32> to vector<256x128xf32>
      %65 = vector.shape_cast %62 : vector<256x128xf32> to vector<1x256x128xf32>
      tpu.vector_store %arg7[%c0_39, %c0_40, %c0_41], %65 {strides = array<i32>} : memref<1x256x128xf32, #tpu.memory_space<vmem>>, vector<1x256x128xf32>,
    } else {
    }
    return
  }
  func.func @transform_0(%arg0: i32, %arg1: i32) -> (i32, i32, i32) {
    %c0_i32 = arith.constant 0 : i32
    %c0_i32_0 = arith.constant 0 : i32
    return %arg0, %arg1, %c0_i32 : i32, i32, i32
  }
  func.func @transform_1(%arg0: i32, %arg1: i32) -> (i32, i32) {
    %c0_i32 = arith.constant 0 : i32
    %c0_i32_0 = arith.constant 0 : i32
    %c0_i32_1 = arith.constant 0 : i32
    return %c0_i32, %c0_i32_0 : i32, i32
  }
  func.func @transform_2(%arg0: i32, %arg1: i32) -> (i32, i32) {
    %c0_i32 = arith.constant 0 : i32
    %c0_i32_0 = arith.constant 0 : i32
    %c0_i32_1 = arith.constant 0 : i32
    return %c0_i32, %c0_i32_0 : i32, i32
  }
  func.func @transform_3(%arg0: i32, %arg1: i32) -> (i32, i32) {
    %c0_i32 = arith.constant 0 : i32
    %c0_i32_0 = arith.constant 0 : i32
    %c0_i32_1 = arith.constant 0 : i32
    return %c0_i32, %c0_i32_0 : i32, i32
  }
  func.func @transform_4(%arg0: i32, %arg1: i32) -> (i32, i32) {
    %c0_i32 = arith.constant 0 : i32
    %c0_i32_0 = arith.constant 0 : i32
    %c0_i32_1 = arith.constant 0 : i32
    return %c0_i32, %c0_i32_0 : i32, i32
  }
  func.func @transform_5(%arg0: i32, %arg1: i32) -> (i32, i32, i32) {
    %c0_i32 = arith.constant 0 : i32
    %c0_i32_0 = arith.constant 0 : i32
    %c0_i32_1 = arith.constant 0 : i32
    return %arg0, %c0_i32, %c0_i32_0 : i32, i32, i32
  }
}

</mosaic_0001>

<llo_original>
// kernel: tpu_custom_call.1
$region0: #{tpu_custom_call.1}
  #allocation0 [shape = 'u32[]', space=smem, size = 0x4, offset = 0x4, fixed_abs, tag = 'smem constant byte address 0x4 - core index']
  #allocation1 [shape = 'u32[144,128]{1,0:T(1,128)}', space=vmem, size = 0x12000, scoped, tag = 'internal scratch']
  #allocation2 [shape = 'f32[1,128]{1,0:T(1,128)}', space=vmem, size = 0x200, scoped, tag = 'scratch operand']
  #allocation3 [shape = 'f32[1,128]{1,0:T(1,128)}', space=vmem, size = 0x200, scoped, tag = 'scratch operand']
  %s0 = inlined_call_operand.hbm [shape: f32[2,256,128], index: 0, kind: input, shape index: {}]
  %s1 = inlined_call_operand.hbm [shape: bf16[128,256], index: 1, kind: input, shape index: {}]
  %s2 = inlined_call_operand.vmem [shape: f32[1,256], index: 2, kind: input, shape index: {}]
  %s3 = inlined_call_operand.hbm [shape: bf16[256,128], index: 3, kind: input, shape index: {}]
  %s4 = inlined_call_operand.vmem [shape: f32[1,128], index: 4, kind: input, shape index: {}]
  %s5 = inlined_call_operand.hbm [shape: f32[2,256,128], index: 5, kind: output, shape index: {}]
  %s6 = sld [smem:[#allocation0]]
  $region73: #{tpu_custom_call.1} parent=0
    _
  %s8 = ssub.s32 1, %s6
  %s9 = scalar_select 0, %s8, %s6
  $region1: #{tpu_custom_call.1} parent=0
    #allocation4 [shape = 'u8[131072]{0}', space=vmem, size = 0x20000, scoped, tag = 'input window, operand 0']
    #allocation5 [shape = 's32[2]{0}', space=sflag, size = 0x8, scoped, tag = 'scoped memory for tpu_custom_call.1']
    #allocation6 [shape = 's32[2]{0}', space=sflag, size = 0x8, scoped, tag = 'scoped memory for tpu_custom_call.1']
    #allocation7 [shape = 'u8[65536]{0}', space=vmem, size = 0x10000, scoped, tag = 'input window, operand 1, single buffered']
    #allocation8 [shape = 's32[1]{0}', space=sflag, size = 0x4, scoped, tag = 'scoped memory for tpu_custom_call.1']
    #allocation9 [shape = 'u8[65536]{0}', space=vmem, size = 0x10000, scoped, tag = 'input window, operand 3, single buffered']
    #allocation10 [shape = 'u8[262144]{0}', space=vmem, size = 0x40000, scoped, tag = 'output window, operand 0']
    %10 = vsyncpa [#allocation5], 0
    %s11 = scalar_lea.sflag [#allocation5], 1
    %12 = vsyncpa %s11, 0
    %13 = vsyncpa [#allocation8], 0
    %14 = vsyncpa [#allocation6], 0
    %s15 = scalar_lea.sflag [#allocation6], 1
    %16 = vsyncpa %s15, 0
    loop: start=0, step=1, limit=6
    $region2: #{tpu_custom_call.1} parent=1 // loop_pre_header
      _
    $region3: #{tpu_custom_call.1} parent=1 // loop_header
      %s18 = sphi 0, %s22
      %p19 = scmp.ge.s32.totalorder %s18, 6
      %s25 = sphi 0, %s37
      %s26 = sphi 0, %s33
      %s27 = sphi 0, %s25
      %s28 = sphi 0, %s26
      %s29 = sphi 0, %s27
      %s30 = sphi 0, %s28
      %s42 = sphi 0, %s44
      %s45 = sphi 0, %s42
      %s46 = sphi 0, %s45
      %s62 = sphi 0, %s46
      %s66 = sphi 0, %s66
      %s68 = sphi 0, %s66
      %s69 = sphi 0, %s68
      %s83 = sphi 0, %s69
      %s87 = sphi 0, %s87
      %s89 = sphi 0, %s87
      %s90 = sphi 0, %s89
      %s104 = sphi 0, %s90
      %s108 = sphi 0, %s108
      %s110 = sphi 0, %s108
      %s111 = sphi 0, %s110
      %s125 = sphi 0, %s111
      %s129 = sphi 0, %s129
      %s131 = sphi 0, %s129
      %s132 = sphi 0, %s131
      %s146 = sphi 0, %s132
      %s152 = sphi 0, %s154
      %s155 = sphi 0, %s152
      %s156 = sphi 0, %s155
      %s172 = sphi 0, %s156
    $region4: #{tpu_custom_call.1} parent=1 // loop_header_branch
      %21 = sbr.rel (%p19) target = $region8
    $region5: #{tpu_custom_call.1} parent=1 // loop_body
      %s23 = ssub.s32 %s18, 1
      %s24 = ssub.s32 %s18, 2
      %s31 = sadd.s32 1, %s26
      %p32 = scmp.ge.s32.totalorder %s31, 2
      %s33 = scalar_select %p32, 0, %s31
      %s34 = sadd.s32 1, %s25
      %s35 = scalar_select %p32, %s34, %s25
      %p36 = scmp.ge.s32.totalorder %s35, 2
      %s37 = scalar_select %p36, 0, %s35
      %s38 = ssub.s32 %s25, %s37
      %s39 = ssub.s32 %s26, %s33
      %s40 = sor.u32 %s38, %s39
      %p41 = scmp.eq.s32.totalorder %s40, 0
      %s43 = sadd.s32 %s42, 1
      %s44 = scalar_select %p41, %s42, %s43
      %p47 = pneg %p41
      %p48 = scmp.eq.s32.totalorder %s18, 3
      %p49 = por %p47, %p48
      %p50 = scmp.ne.s32.totalorder %s42, %s45
      %p51 = scmp.eq.s32.totalorder %s18, 0
      %p52 = por %p50, %p51
      %p53 = scmp.ne.s32.totalorder %s42, %s45
      %p54 = scmp.eq.s32.totalorder %s23, 3
      %p55 = por %p53, %p54
      %p56 = scmp.ne.s32.totalorder %s45, %s46
      %p57 = scmp.eq.s32.totalorder %s23, 0
      %p58 = por %p56, %p57
      %p59 = scmp.ne.s32.totalorder %s45, %s46
      %p60 = scmp.eq.s32.totalorder %s24, 3
      %p61 = por %p59, %p60
      %p63 = scmp.ne.s32.totalorder %s46, %s62
      %p64 = scmp.eq.s32.totalorder %s24, 0
      %p65 = por %p63, %p64
      %s67 = sadd.s32 %s66, 1
      %p70 = scmp.eq.s32.totalorder %s18, 3
      %p71 = scmp.ne.s32.totalorder %s66, %s68
      %p72 = scmp.eq.s32.totalorder %s18, 0
      %p73 = por %p71, %p72
      %p74 = scmp.ne.s32.totalorder %s66, %s68
      %p75 = scmp.eq.s32.totalorder %s23, 3
      %p76 = por %p74, %p75
      %p77 = scmp.ne.s32.totalorder %s68, %s69
      %p78 = scmp.eq.s32.totalorder %s23, 0
      %p79 = por %p77, %p78
      %p80 = scmp.ne.s32.totalorder %s68, %s69
      %p81 = scmp.eq.s32.totalorder %s24, 3
      %p82 = por %p80, %p81
      %p84 = scmp.ne.s32.totalorder %s69, %s83
      %p85 = scmp.eq.s32.totalorder %s24, 0
      %p86 = por %p84, %p85
      %s88 = sadd.s32 %s87, 1
      %p91 = scmp.eq.s32.totalorder %s18, 3
      %p92 = scmp.ne.s32.totalorder %s87, %s89
      %p93 = scmp.eq.s32.totalorder %s18, 0
      %p94 = por %p92, %p93
      %p95 = scmp.ne.s32.totalorder %s87, %s89
      %p96 = scmp.eq.s32.totalorder %s23, 3
      %p97 = por %p95, %p96
      %p98 = scmp.ne.s32.totalorder %s89, %s90
      %p99 = scmp.eq.s32.totalorder %s23, 0
      %p100 = por %p98, %p99
      %p101 = scmp.ne.s32.totalorder %s89, %s90
      %p102 = scmp.eq.s32.totalorder %s24, 3
      %p103 = por %p101, %p102
      %p105 = scmp.ne.s32.totalorder %s90, %s104
      %p106 = scmp.eq.s32.totalorder %s24, 0
      %p107 = por %p105, %p106
      %s109 = sadd.s32 %s108, 1
      %p112 = scmp.eq.s32.totalorder %s18, 3
      %p113 = scmp.ne.s32.totalorder %s108, %s110
      %p114 = scmp.eq.s32.totalorder %s18, 0
      %p115 = por %p113, %p114
      %p116 = scmp.ne.s32.totalorder %s108, %s110
      %p117 = scmp.eq.s32.totalorder %s23, 3
      %p118 = por %p116, %p117
      %p119 = scmp.ne.s32.totalorder %s110, %s111
      %p120 = scmp.eq.s32.totalorder %s23, 0
      %p121 = por %p119, %p120
      %p122 = scmp.ne.s32.totalorder %s110, %s111
      %p123 = scmp.eq.s32.totalorder %s24, 3
      %p124 = por %p122, %p123
      %p126 = scmp.ne.s32.totalorder %s111, %s125
      %p127 = scmp.eq.s32.totalorder %s24, 0
      %p128 = por %p126, %p127
      %s130 = sadd.s32 %s129, 1
      %p133 = scmp.eq.s32.totalorder %s18, 3
      %p134 = scmp.ne.s32.totalorder %s129, %s131
      %p135 = scmp.eq.s32.totalorder %s18, 0
      %p136 = por %p134, %p135
      %p137 = scmp.ne.s32.totalorder %s129, %s131
      %p138 = scmp.eq.s32.totalorder %s23, 3
      %p139 = por %p137, %p138
      %p140 = scmp.ne.s32.totalorder %s131, %s132
      %p141 = scmp.eq.s32.totalorder %s23, 0
      %p142 = por %p140, %p141
      %p143 = scmp.ne.s32.totalorder %s131, %s132
      %p144 = scmp.eq.s32.totalorder %s24, 3
      %p145 = por %p143, %p144
      %p147 = scmp.ne.s32.totalorder %s132, %s146
      %p148 = scmp.eq.s32.totalorder %s24, 0
      %p149 = por %p147, %p148
      %s150 = ssub.s32 %s25, %s37
      %p151 = scmp.eq.s32.totalorder %s150, 0
      %s153 = sadd.s32 %s152, 1
      %s154 = scalar_select %p151, %s152, %s153
      %p157 = pneg %p151
      %p158 = scmp.eq.s32.totalorder %s18, 3
      %p159 = por %p157, %p158
      %p160 = scmp.ne.s32.totalorder %s152, %s155
      %p161 = scmp.eq.s32.totalorder %s18, 0
      %p162 = por %p160, %p161
      %p163 = scmp.ne.s32.totalorder %s152, %s155
      %p164 = scmp.eq.s32.totalorder %s23, 3
      %p165 = por %p163, %p164
      %p166 = scmp.ne.s32.totalorder %s155, %s156
      %p167 = scmp.eq.s32.totalorder %s23, 0
      %p168 = por %p166, %p167
      %p169 = scmp.ne.s32.totalorder %s155, %s156
      %p170 = scmp.eq.s32.totalorder %s24, 3
      %p171 = por %p169, %p170
      %p173 = scmp.ne.s32.totalorder %s156, %s172
      %p174 = scmp.eq.s32.totalorder %s24, 0
      %p175 = por %p173, %p174
      %p176 = scmp.le.s32.totalorder 1, %s18
      %p177 = scmp.lt.s32.totalorder %s18, 5
      %p178 = pnand %p176, %p177
      %p179 = pneg %p178
      // Predicated region
      $region9: #{tpu_custom_call.1} parent=5 // pred_check
        _
      $region10: #{tpu_custom_call.1} parent=5 // pred_check_branch
        %181 = sbr.rel (%p178) target = $region12
      $region11: #{tpu_custom_call.1} parent=5 // pred_region
        %s182 = ssub.s32 %s18, 1
        // Predicated region
        $region13: #{tpu_custom_call.1} parent=11 // pred_check
          %p183 = pneg %p79
        $region14: #{tpu_custom_call.1} parent=11 // pred_check_branch
          %185 = sbr.rel (%p183) target = $region16
        $region15: #{tpu_custom_call.1} parent=11 // pred_region
          %s187 = ssub.s32 2048, 2048
          %188 = vsyncadd [#allocation8], %s187
          %s189 = sshll.u32 [#allocation7], 4
          %s190 = int_to_ptr.vmem [resolvable:$true] %s189
          %195 = dma.hbm_to_vmem [thread:$0]  %s1, 2048, %s190, [#allocation8], 128, 128, 8
        $region16: #{tpu_custom_call.1} parent=11 // pred_fallthru
          _
        // Predicated region
        $region17: #{tpu_custom_call.1} parent=11 // pred_check
          %p196 = pneg %p100
        $region18: #{tpu_custom_call.1} parent=11 // pred_check_branch
          %198 = sbr.rel (%p196) target = $region20
        $region19: #{tpu_custom_call.1} parent=11 // pred_region
          _
        $region20: #{tpu_custom_call.1} parent=11 // pred_fallthru
          _
        // Predicated region
        $region21: #{tpu_custom_call.1} parent=11 // pred_check
          %p199 = pneg %p121
        $region22: #{tpu_custom_call.1} parent=11 // pred_check_branch
          %201 = sbr.rel (%p199) target = $region24
        $region23: #{tpu_custom_call.1} parent=11 // pred_region
          %s203 = ssub.s32 2048, 2048
          %204 = vsyncadd [#allocation8], %s203
          %s205 = sshll.u32 [#allocation9], 4
          %s206 = int_to_ptr.vmem [resolvable:$true] %s205
          %211 = dma.hbm_to_vmem [thread:$0]  %s3, 2048, %s206, [#allocation8], 64, 64, 4
        $region24: #{tpu_custom_call.1} parent=11 // pred_fallthru
          _
        // Predicated region
        $region25: #{tpu_custom_call.1} parent=11 // pred_check
          %p212 = pneg %p142
        $region26: #{tpu_custom_call.1} parent=11 // pred_check_branch
          %214 = sbr.rel (%p212) target = $region28
        $region27: #{tpu_custom_call.1} parent=11 // pred_region
          _
        $region28: #{tpu_custom_call.1} parent=11 // pred_fallthru
          _
      $region12: #{tpu_custom_call.1} parent=5 // pred_fallthru
        _
      %p215 = scmp.lt.s32.totalorder %s18, 4
      // Predicated region
      $region29: #{tpu_custom_call.1} parent=5 // pred_check
        %p216 = pneg %p215
      $region30: #{tpu_custom_call.1} parent=5 // pred_check_branch
        %218 = sbr.rel (%p216) target = $region32
      $region31: #{tpu_custom_call.1} parent=5 // pred_region
        // Predicated region
        $region33: #{tpu_custom_call.1} parent=31 // pred_check
          %p219 = pneg %p52
        $region34: #{tpu_custom_call.1} parent=31 // pred_check_branch
          %221 = sbr.rel (%p219) target = $region36
        $region35: #{tpu_custom_call.1} parent=31 // pred_region
          %s222 = sand.u32 %s42, 1
          %s223 = scalar_lea.sflag [#allocation5], %s222
          %s224 = sand.u32 %s42, 1
          %s225 = smul.addr %s224, 128
          %s226 = scalar_lea.vmem [#allocation4], %s225
          %s227 = smul.u32 16, %s26
          %s229 = ssub.s32 2048, 2048
          %230 = vsyncadd %s223, %s229
          %s231 = smul.addr %s25, 32
          %s232 = sadd.s32 %s227, %s231
          %s233 = smul.addr %s232, 128
          %s234 = scalar_lea.hbm %s0, %s233
          %s235 = sshll.u32 %s226, 4
          %s236 = int_to_ptr.vmem [resolvable:$true] %s235
          %241 = dma.hbm_to_vmem [thread:$0]  %s234, 2048, %s236, %s223, 128, 128, 8
        $region36: #{tpu_custom_call.1} parent=31 // pred_fallthru
          _
      $region32: #{tpu_custom_call.1} parent=5 // pred_fallthru
        _
      %p242 = scmp.le.s32.totalorder 1, %s18
      %p243 = scmp.lt.s32.totalorder %s18, 5
      %p244 = pnand %p242, %p243
      %p245 = pneg %p244
      // Predicated region
      $region37: #{tpu_custom_call.1} parent=5 // pred_check
        _
      $region38: #{tpu_custom_call.1} parent=5 // pred_check_branch
        %247 = sbr.rel (%p244) target = $region40
      $region39: #{tpu_custom_call.1} parent=5 // pred_region
        %s248 = ssub.s32 %s18, 1
        %s249 = sand.u32 %s45, 1
        %s250 = scalar_lea.sflag [#allocation5], %s249
        %s251 = sand.u32 %s45, 1
        %s252 = smul.addr %s251, 128
        %s253 = scalar_lea.vmem [#allocation4], %s252
        // Predicated region
        $region41: #{tpu_custom_call.1} parent=39 // pred_check
          %p254 = pneg %p58
        $region42: #{tpu_custom_call.1} parent=39 // pred_check_branch
          %256 = sbr.rel (%p254) target = $region44
        $region43: #{tpu_custom_call.1} parent=39 // pred_region
          %257 = dma.done %s250, 2048
        $region44: #{tpu_custom_call.1} parent=39 // pred_fallthru
          _
        // Predicated region
        $region45: #{tpu_custom_call.1} parent=39 // pred_check
          %p258 = pneg %p79
        $region46: #{tpu_custom_call.1} parent=39 // pred_check_branch
          %260 = sbr.rel (%p258) target = $region48
        $region47: #{tpu_custom_call.1} parent=39 // pred_region
          %261 = dma.done [#allocation8], 2048
        $region48: #{tpu_custom_call.1} parent=39 // pred_fallthru
          _
        // Predicated region
        $region49: #{tpu_custom_call.1} parent=39 // pred_check
          %p262 = pneg %p121
        $region50: #{tpu_custom_call.1} parent=39 // pred_check_branch
          %264 = sbr.rel (%p262) target = $region52
        $region51: #{tpu_custom_call.1} parent=39 // pred_region
          %265 = dma.done [#allocation8], 2048
        $region52: #{tpu_custom_call.1} parent=39 // pred_fallthru
          _
        %s266 = sand.u32 %s45, 1
        %s267 = scalar_lea.sflag [#allocation5], %s266
        %s268 = sand.u32 %s45, 1
        %s269 = smul.addr %s268, 128
        %s270 = scalar_lea.vmem [#allocation4], %s269
        %p271 = pneg %p58
        %p272 = pneg %p55
        %p273 = pneg %p79
        %p274 = pneg %p76
        %p275 = pneg %p100
        %p276 = pneg %p97
        %p277 = pneg %p121
        %p278 = pneg %p118
        %p279 = pneg %p142
        %p280 = pneg %p139
        %p281 = pneg %p168
        %p282 = pneg %p165
        %s283 = sand.u32 %s155, 1
        %s284 = scalar_lea.sflag [#allocation6], %s283
        %s285 = sand.u32 %s155, 1
        %s286 = smul.addr %s285, 256
        %s287 = scalar_lea.vmem [#allocation10], %s286
        %s288 = smul.u32 16, %s28
        %p290 = scmp.eq.s32.totalorder %s28, 0
        // Predicated region
        $region53: #{tpu_custom_call.1} parent=39 // pred_check
          %p291 = pneg %p290
        $region54: #{tpu_custom_call.1} parent=39 // pred_check_branch
          %293 = sbr.rel (%p291) target = $region56
        $region55: #{tpu_custom_call.1} parent=39 // pred_region
          %294 = vst [vmem:[#allocation2] sm:$0x1] 0.0
          %295 = vst [vmem:[#allocation3] sm:$0x1] 0.0
        $region56: #{tpu_custom_call.1} parent=39 // pred_fallthru
          _
        %v296 = vld [vmem:[%s253] sm:$0xff]
        %v297 = vld [vmem:[%s253 + $0x8] sm:$0xff]
        %v298 = vld [vmem:[%s253 + $0x10] sm:$0xff]
        %v299 = vld [vmem:[%s253 + $0x18] sm:$0xff]
        %v300 = vld [vmem:[%s253 + $0x20] sm:$0xff]
        %v301 = vld [vmem:[%s253 + $0x28] sm:$0xff]
        %v302 = vld [vmem:[%s253 + $0x30] sm:$0xff]
        %v303 = vld [vmem:[%s253 + $0x38] sm:$0xff]
        %v304 = vld [vmem:[%s253 + $0x40] sm:$0xff]
        %v305 = vld [vmem:[%s253 + $0x48] sm:$0xff]
        %v306 = vld [vmem:[%s253 + $0x50] sm:$0xff]
        %v307 = vld [vmem:[%s253 + $0x58] sm:$0xff]
        %v308 = vld [vmem:[%s253 + $0x60] sm:$0xff]
        %v309 = vld [vmem:[%s253 + $0x68] sm:$0xff]
        %v310 = vld [vmem:[%s253 + $0x70] sm:$0xff]
        %v311 = vld [vmem:[%s253 + $0x78] sm:$0xff]
        %v312 = vpack.c.bf16 %v297, %v296
        %v313 = vpack.c.bf16 %v299, %v298
        %v314 = vpack.c.bf16 %v301, %v300
        %v315 = vpack.c.bf16 %v303, %v302
        %v316 = vpack.c.bf16 %v305, %v304
        %v317 = vpack.c.bf16 %v307, %v306
        %v318 = vpack.c.bf16 %v309, %v308
        %v319 = vpack.c.bf16 %v311, %v310
        %v320 = vld [vmem:[#allocation7] sm:$0xff]
        %v321 = vld [vmem:[#allocation7 + $0x8] sm:$0xff]
        %v322 = vld [vmem:[#allocation7 + $0x10] sm:$0xff]
        %v323 = vld [vmem:[#allocation7 + $0x18] sm:$0xff]
        %v324 = vld [vmem:[#allocation7 + $0x20] sm:$0xff]
        %v325 = vld [vmem:[#allocation7 + $0x28] sm:$0xff]
        %v326 = vld [vmem:[#allocation7 + $0x30] sm:$0xff]
        %v327 = vld [vmem:[#allocation7 + $0x38] sm:$0xff]
        %v328 = vld [vmem:[#allocation7 + $0x40] sm:$0xff]
        %v329 = vld [vmem:[#allocation7 + $0x48] sm:$0xff]
        %v330 = vld [vmem:[#allocation7 + $0x50] sm:$0xff]
        %v331 = vld [vmem:[#allocation7 + $0x58] sm:$0xff]
        %v332 = vld [vmem:[#allocation7 + $0x60] sm:$0xff]
        %v333 = vld [vmem:[#allocation7 + $0x68] sm:$0xff]
        %v334 = vld [vmem:[#allocation7 + $0x70] sm:$0xff]
        %v335 = vld [vmem:[#allocation7 + $0x78] sm:$0xff]
        %v336 = vld [vmem:[%s2] sm:$0x3]
        %v338 = vlaneseq
        %v339 = vshrl.u32 %v338, 7
        %v340 = vsub.s32 0, %v339
        %v341 = vrot.slane %v336, %v340
        %v342 = vlaneseq
        %v343 = vshrl.u32 %v342, 7
        %v344 = vsub.s32 1, %v343
        %v345 = vrot.slane %v336, %v344
        %v364 = vunpack.c.l.b16 %v320
        %v365 = vunpack.c.h.b16 %v320
        %v366 = vunpack.c.l.b16 %v321
        %v367 = vunpack.c.h.b16 %v321
        %v368 = vunpack.c.l.b16 %v322
        %v369 = vunpack.c.h.b16 %v322
        %v370 = vunpack.c.l.b16 %v323
        %v371 = vunpack.c.h.b16 %v323
        %v372 = vunpack.c.l.b16 %v324
        %v373 = vunpack.c.h.b16 %v324
        %v374 = vunpack.c.l.b16 %v325
        %v375 = vunpack.c.h.b16 %v325
        %v376 = vunpack.c.l.b16 %v326
        %v377 = vunpack.c.h.b16 %v326
        %v378 = vunpack.c.l.b16 %v327
        %v379 = vunpack.c.h.b16 %v327
        %v380 = vunpack.c.l.b16 %v328
        %v381 = vunpack.c.h.b16 %v328
        %v382 = vunpack.c.l.b16 %v329
        %v383 = vunpack.c.h.b16 %v329
        %v384 = vunpack.c.l.b16 %v330
        %v385 = vunpack.c.h.b16 %v330
        %v386 = vunpack.c.l.b16 %v331
        %v387 = vunpack.c.h.b16 %v331
        %v388 = vunpack.c.l.b16 %v332
        %v389 = vunpack.c.h.b16 %v332
        %v390 = vunpack.c.l.b16 %v333
        %v391 = vunpack.c.h.b16 %v333
        %v392 = vunpack.c.l.b16 %v334
        %v393 = vunpack.c.h.b16 %v334
        %v394 = vunpack.c.l.b16 %v335
        %v395 = vunpack.c.h.b16 %v335
        %v396 = vpack.c.b16 %v366, %v364
        %v397 = vpack.c.b16 %v367, %v365
        %v398 = vpack.c.b16 %v370, %v368
        %v399 = vpack.c.b16 %v371, %v369
        %v400 = vpack.c.b16 %v374, %v372
        %v401 = vpack.c.b16 %v375, %v373
        %v402 = vpack.c.b16 %v378, %v376
        %v403 = vpack.c.b16 %v379, %v377
        %v404 = vpack.c.b16 %v382, %v380
        %v405 = vpack.c.b16 %v383, %v381
        %v406 = vpack.c.b16 %v386, %v384
        %v407 = vpack.c.b16 %v387, %v385
        %v408 = vpack.c.b16 %v390, %v388
        %v409 = vpack.c.b16 %v391, %v389
        %v410 = vpack.c.b16 %v394, %v392
        %v411 = vpack.c.b16 %v395, %v393
        %428 = vmatprep.subr.bf16.mxu0 %v411
        %429 = vmatpush1.bf16.msra.mxu0 %v410
        %430 = vmatprep.subr.bf16.mxu0 %v409
        %431 = vmatpush1.bf16.msra.mxu0 %v408
        %432 = vmatprep.subr.bf16.mxu0 %v407
        %433 = vmatpush1.bf16.msra.mxu0 %v406
        %434 = vmatprep.subr.bf16.mxu0 %v405
        %435 = vmatpush1.bf16.msra.mxu0 %v404
        %436 = vmatprep.subr.bf16.mxu0 %v403
        %437 = vmatpush1.bf16.msra.mxu0 %v402
        %438 = vmatprep.subr.bf16.mxu0 %v401
        %439 = vmatpush1.bf16.msra.mxu0 %v400
        %440 = vmatprep.subr.bf16.mxu0 %v399
        %441 = vmatpush1.bf16.msra.mxu0 %v398
        %442 = vmatprep.subr.bf16.mxu0 %v397
        %443 = vmatpush1.bf16.msra.mxu0 %v396
        %444 = vmatprep.subr.bf16.mxu0 0
        %445 = vmatpush2.bf16.msra.mxu0 0
        %446 = vmatprep.subr.bf16.mxu0 0
        %447 = vmatpush2.bf16.msra.mxu0 0
        %448 = vmatprep.subr.bf16.mxu0 0
        %449 = vmatpush2.bf16.msra.mxu0 0
        %450 = vmatprep.subr.bf16.mxu0 0
        %451 = vmatpush2.bf16.msra.mxu0 0
        %452 = vmatprep.subr.bf16.mxu0 0
        %453 = vmatpush2.bf16.msra.mxu0 0
        %454 = vmatprep.subr.bf16.mxu0 0
        %455 = vmatpush2.bf16.msra.mxu0 0
        %456 = vmatprep.subr.bf16.mxu0 0
        %457 = vmatpush2.bf16.msra.mxu0 0
        %458 = vmatprep.subr.bf16.mxu0 0
        %459 = vmatpush2.bf16.msra.mxu0 0
        %460 = vmatprep.mubr.bf16.mxu0 0
        %461 = vmatmul.mubr.bf16.gmra.mxu0 %v312
        %v462 = vpop.f32.mrf.mxu0
        %v463 = vadd.f32 %v341, %v462
        %v464 = vpop.f32.mrf.mxu0
        %v465 = vadd.f32 %v345, %v464
        %v466 = vpop.f32.mrf.mxu0
        %v467 = vadd.f32 %v341, %v466
        %v468 = vpop.f32.mrf.mxu0
        %v469 = vadd.f32 %v345, %v468
        %470 = vmatprep.mubr.bf16.mxu0 0
        %471 = vmatmul.mubr.bf16.gmra.mxu0 %v313
        %v472 = vpop.f32.mrf.mxu0
        %v473 = vadd.f32 %v341, %v472
        %v474 = vpop.f32.mrf.mxu0
        %v475 = vadd.f32 %v345, %v474
        %v476 = vpop.f32.mrf.mxu0
        %v477 = vadd.f32 %v341, %v476
        %v478 = vpop.f32.mrf.mxu0
        %v479 = vadd.f32 %v345, %v478
        %480 = vmatprep.mubr.bf16.mxu0 0
        %481 = vmatmul.mubr.bf16.gmra.mxu0 %v314
        %v482 = vpop.f32.mrf.mxu0
        %v483 = vadd.f32 %v341, %v482
        %v484 = vpop.f32.mrf.mxu0
        %v485 = vadd.f32 %v345, %v484
        %v486 = vpop.f32.mrf.mxu0
        %v487 = vadd.f32 %v341, %v486
        %v488 = vpop.f32.mrf.mxu0
        %v489 = vadd.f32 %v345, %v488
        %490 = vmatprep.mubr.bf16.mxu0 0
        %491 = vmatmul.mubr.bf16.gmra.mxu0 %v315
        %v492 = vpop.f32.mrf.mxu0
        %v493 = vadd.f32 %v341, %v492
        %v494 = vpop.f32.mrf.mxu0
        %v495 = vadd.f32 %v345, %v494
        %v496 = vpop.f32.mrf.mxu0
        %v497 = vadd.f32 %v341, %v496
        %v498 = vpop.f32.mrf.mxu0
        %v499 = vadd.f32 %v345, %v498
        %500 = vmatprep.mubr.bf16.mxu0 0
        %501 = vmatmul.mubr.bf16.gmra.mxu0 %v316
        %v502 = vpop.f32.mrf.mxu0
        %v503 = vadd.f32 %v341, %v502
        %v504 = vpop.f32.mrf.mxu0
        %v505 = vadd.f32 %v345, %v504
        %v506 = vpop.f32.mrf.mxu0
        %v507 = vadd.f32 %v341, %v506
        %v508 = vpop.f32.mrf.mxu0
        %v509 = vadd.f32 %v345, %v508
        %510 = vmatprep.mubr.bf16.mxu0 0
        %511 = vmatmul.mubr.bf16.gmra.mxu0 %v317
        %v512 = vpop.f32.mrf.mxu0
        %v513 = vadd.f32 %v341, %v512
        %v514 = vpop.f32.mrf.mxu0
        %v515 = vadd.f32 %v345, %v514
        %v516 = vpop.f32.mrf.mxu0
        %v517 = vadd.f32 %v341, %v516
        %v518 = vpop.f32.mrf.mxu0
        %v519 = vadd.f32 %v345, %v518
        %520 = vmatprep.mubr.bf16.mxu0 0
        %521 = vmatmul.mubr.bf16.gmra.mxu0 %v318
        %v522 = vpop.f32.mrf.mxu0
        %v523 = vadd.f32 %v341, %v522
        %v524 = vpop.f32.mrf.mxu0
        %v525 = vadd.f32 %v345, %v524
        %v526 = vpop.f32.mrf.mxu0
        %v527 = vadd.f32 %v341, %v526
        %v528 = vpop.f32.mrf.mxu0
        %v529 = vadd.f32 %v345, %v528
        %530 = vmatprep.mubr.bf16.mxu0 0
        %531 = vmatmul.mubr.bf16.gmra.mxu0 %v319
        %v532 = vpop.f32.mrf.mxu0
        %v533 = vadd.f32 %v341, %v532
        %v534 = vpop.f32.mrf.mxu0
        %v535 = vadd.f32 %v345, %v534
        %v536 = vpop.f32.mrf.mxu0
        %v537 = vadd.f32 %v341, %v536
        %v538 = vpop.f32.mrf.mxu0
        %v539 = vadd.f32 %v345, %v538
        %540 = vdwg.mxu0
        %v541 = vpack.c.bf16 %v467, %v463
        %v542 = vpack.c.bf16 %v469, %v465
        %v543 = vpack.c.bf16 %v477, %v473
        %v544 = vpack.c.bf16 %v479, %v475
        %v545 = vpack.c.bf16 %v487, %v483
        %v546 = vpack.c.bf16 %v489, %v485
        %v547 = vpack.c.bf16 %v497, %v493
        %v548 = vpack.c.bf16 %v499, %v495
        %v549 = vpack.c.bf16 %v507, %v503
        %v550 = vpack.c.bf16 %v509, %v505
        %v551 = vpack.c.bf16 %v517, %v513
        %v552 = vpack.c.bf16 %v519, %v515
        %v553 = vpack.c.bf16 %v527, %v523
        %v554 = vpack.c.bf16 %v529, %v525
        %v555 = vpack.c.bf16 %v537, %v533
        %v556 = vpack.c.bf16 %v539, %v535
        %v557 = vmax.bf16 %v541, 0
        %v558 = vmax.bf16 %v542, 0
        %v559 = vmax.bf16 %v543, 0
        %v560 = vmax.bf16 %v544, 0
        %v561 = vmax.bf16 %v545, 0
        %v562 = vmax.bf16 %v546, 0
        %v563 = vmax.bf16 %v547, 0
        %v564 = vmax.bf16 %v548, 0
        %v565 = vmax.bf16 %v549, 0
        %v566 = vmax.bf16 %v550, 0
        %v567 = vmax.bf16 %v551, 0
        %v568 = vmax.bf16 %v552, 0
        %v569 = vmax.bf16 %v553, 0
        %v570 = vmax.bf16 %v554, 0
        %v571 = vmax.bf16 %v555, 0
        %v572 = vmax.bf16 %v556, 0
        %v573 = vld [vmem:[#allocation9] sm:$0xf]
        %v574 = vld [vmem:[#allocation9 + $0x4] sm:$0xf]
        %v575 = vld [vmem:[#allocation9 + $0x8] sm:$0xf]
        %v576 = vld [vmem:[#allocation9 + $0xc] sm:$0xf]
        %v577 = vld [vmem:[#allocation9 + $0x10] sm:$0xf]
        %v578 = vld [vmem:[#allocation9 + $0x14] sm:$0xf]
        %v579 = vld [vmem:[#allocation9 + $0x18] sm:$0xf]
        %v580 = vld [vmem:[#allocation9 + $0x1c] sm:$0xf]
        %v581 = vld [vmem:[#allocation9 + $0x20] sm:$0xf]
        %v582 = vld [vmem:[#allocation9 + $0x24] sm:$0xf]
        %v583 = vld [vmem:[#allocation9 + $0x28] sm:$0xf]
        %v584 = vld [vmem:[#allocation9 + $0x2c] sm:$0xf]
        %v585 = vld [vmem:[#allocation9 + $0x30] sm:$0xf]
        %v586 = vld [vmem:[#allocation9 + $0x34] sm:$0xf]
        %v587 = vld [vmem:[#allocation9 + $0x38] sm:$0xf]
        %v588 = vld [vmem:[#allocation9 + $0x3c] sm:$0xf]
        %v589 = vld [vmem:[#allocation9 + $0x40] sm:$0xf]
        %v590 = vld [vmem:[#allocation9 + $0x44] sm:$0xf]
        %v591 = vld [vmem:[#allocation9 + $0x48] sm:$0xf]
        %v592 = vld [vmem:[#allocation9 + $0x4c] sm:$0xf]
        %v593 = vld [vmem:[#allocation9 + $0x50] sm:$0xf]
        %v594 = vld [vmem:[#allocation9 + $0x54] sm:$0xf]
        %v595 = vld [vmem:[#allocation9 + $0x58] sm:$0xf]
        %v596 = vld [vmem:[#allocation9 + $0x5c] sm:$0xf]
        %v597 = vld [vmem:[#allocation9 + $0x60] sm:$0xf]
        %v598 = vld [vmem:[#allocation9 + $0x64] sm:$0xf]
        %v599 = vld [vmem:[#allocation9 + $0x68] sm:$0xf]
        %v600 = vld [vmem:[#allocation9 + $0x6c] sm:$0xf]
        %v601 = vld [vmem:[#allocation9 + $0x70] sm:$0xf]
        %v602 = vld [vmem:[#allocation9 + $0x74] sm:$0xf]
        %v603 = vld [vmem:[#allocation9 + $0x78] sm:$0xf]
        %v604 = vld [vmem:[#allocation9 + $0x7c] sm:$0xf]
        %v605 = vld [vmem:[%s4] sm:$0x1]
        %v607 = vlaneseq
        %v608 = vshrl.u32 %v607, 7
        %v609 = vsub.s32 0, %v608
        %v610 = vrot.slane %v605, %v609
        %v644 = vunpack.c.l.b16 %v573
        %v645 = vunpack.c.l.b16 %v574
        %v646 = vunpack.c.l.b16 %v575
        %v647 = vunpack.c.l.b16 %v576
        %v648 = vunpack.c.l.b16 %v577
        %v649 = vunpack.c.l.b16 %v578
        %v650 = vunpack.c.l.b16 %v579
        %v651 = vunpack.c.l.b16 %v580
        %v652 = vunpack.c.l.b16 %v581
        %v653 = vunpack.c.l.b16 %v582
        %v654 = vunpack.c.l.b16 %v583
        %v655 = vunpack.c.l.b16 %v584
        %v656 = vunpack.c.l.b16 %v585
        %v657 = vunpack.c.l.b16 %v586
        %v658 = vunpack.c.l.b16 %v587
        %v659 = vunpack.c.l.b16 %v588
        %v660 = vunpack.c.l.b16 %v589
        %v661 = vunpack.c.l.b16 %v590
        %v662 = vunpack.c.l.b16 %v591
        %v663 = vunpack.c.l.b16 %v592
        %v664 = vunpack.c.l.b16 %v593
        %v665 = vunpack.c.l.b16 %v594
        %v666 = vunpack.c.l.b16 %v595
        %v667 = vunpack.c.l.b16 %v596
        %v668 = vunpack.c.l.b16 %v597
        %v669 = vunpack.c.l.b16 %v598
        %v670 = vunpack.c.l.b16 %v599
        %v671 = vunpack.c.l.b16 %v600
        %v672 = vunpack.c.l.b16 %v601
        %v673 = vunpack.c.l.b16 %v602
        %v674 = vunpack.c.l.b16 %v603
        %v675 = vunpack.c.l.b16 %v604
        %v676 = vpack.c.b16 %v645, %v644
        %v677 = vpack.c.b16 %v647, %v646
        %v678 = vpack.c.b16 %v649, %v648
        %v679 = vpack.c.b16 %v651, %v650
        %v680 = vpack.c.b16 %v653, %v652
        %v681 = vpack.c.b16 %v655, %v654
        %v682 = vpack.c.b16 %v657, %v656
        %v683 = vpack.c.b16 %v659, %v658
        %v684 = vpack.c.b16 %v661, %v660
        %v685 = vpack.c.b16 %v663, %v662
        %v686 = vpack.c.b16 %v665, %v664
        %v687 = vpack.c.b16 %v667, %v666
        %v688 = vpack.c.b16 %v669, %v668
        %v689 = vpack.c.b16 %v671, %v670
        %v690 = vpack.c.b16 %v673, %v672
        %v691 = vpack.c.b16 %v675, %v674
        %708 = vmatprep.subr.bf16.mxu0 0
        %709 = vmatpush1.bf16.msra.mxu0 %v683
        %710 = vmatprep.subr.bf16.mxu0 0
        %711 = vmatpush1.bf16.msra.mxu0 %v682
        %712 = vmatprep.subr.bf16.mxu0 0
        %713 = vmatpush1.bf16.msra.mxu0 %v681
        %714 = vmatprep.subr.bf16.mxu0 0
        %715 = vmatpush1.bf16.msra.mxu0 %v680
        %716 = vmatprep.subr.bf16.mxu0 0
        %717 = vmatpush1.bf16.msra.mxu0 %v679
        %718 = vmatprep.subr.bf16.mxu0 0
        %719 = vmatpush1.bf16.msra.mxu0 %v678
        %720 = vmatprep.subr.bf16.mxu0 0
        %721 = vmatpush1.bf16.msra.mxu0 %v677
        %722 = vmatprep.subr.bf16.mxu0 0
        %723 = vmatpush1.bf16.msra.mxu0 %v676
        %724 = vmatprep.subr.bf16.mxu0 0
        %725 = vmatpush2.bf16.msra.mxu0 %v691
        %726 = vmatprep.subr.bf16.mxu0 0
        %727 = vmatpush2.bf16.msra.mxu0 %v690
        %728 = vmatprep.subr.bf16.mxu0 0
        %729 = vmatpush2.bf16.msra.mxu0 %v689
        %730 = vmatprep.subr.bf16.mxu0 0
        %731 = vmatpush2.bf16.msra.mxu0 %v688
        %732 = vmatprep.subr.bf16.mxu0 0
        %733 = vmatpush2.bf16.msra.mxu0 %v687
        %734 = vmatprep.subr.bf16.mxu0 0
        %735 = vmatpush2.bf16.msra.mxu0 %v686
        %736 = vmatprep.subr.bf16.mxu0 0
        %737 = vmatpush2.bf16.msra.mxu0 %v685
        %738 = vmatprep.subr.bf16.mxu0 0
        %739 = vmatpush2.bf16.msra.mxu0 %v684
        %740 = vmatprep.mubr.bf16.mxu0 %v558
        %741 = vmatmul.mubr.bf16.gmra.mxu0 %v557
        %v742 = vpop.f32.mrf.mxu0
        %v743 = vadd.f32 %v610, %v742
        %v744 = vpop.f32.mrf.mxu0
        %v745 = vpop.f32.mrf.mxu0
        %v746 = vadd.f32 %v610, %v745
        %v747 = vpop.f32.mrf.mxu0
        %748 = vmatprep.mubr.bf16.mxu0 %v560
        %749 = vmatmul.mubr.bf16.gmra.mxu0 %v559
        %v750 = vpop.f32.mrf.mxu0
        %v751 = vadd.f32 %v610, %v750
        %v752 = vpop.f32.mrf.mxu0
        %v753 = vpop.f32.mrf.mxu0
        %v754 = vadd.f32 %v610, %v753
        %v755 = vpop.f32.mrf.mxu0
        %756 = vmatprep.mubr.bf16.mxu0 %v562
        %757 = vmatmul.mubr.bf16.gmra.mxu0 %v561
        %v758 = vpop.f32.mrf.mxu0
        %v759 = vadd.f32 %v610, %v758
        %v760 = vpop.f32.mrf.mxu0
        %v761 = vpop.f32.mrf.mxu0
        %v762 = vadd.f32 %v610, %v761
        %v763 = vpop.f32.mrf.mxu0
        %764 = vmatprep.mubr.bf16.mxu0 %v564
        %765 = vmatmul.mubr.bf16.gmra.mxu0 %v563
        %v766 = vpop.f32.mrf.mxu0
        %v767 = vadd.f32 %v610, %v766
        %v768 = vpop.f32.mrf.mxu0
        %v769 = vpop.f32.mrf.mxu0
        %v770 = vadd.f32 %v610, %v769
        %v771 = vpop.f32.mrf.mxu0
        %772 = vmatprep.mubr.bf16.mxu0 %v566
        %773 = vmatmul.mubr.bf16.gmra.mxu0 %v565
        %v774 = vpop.f32.mrf.mxu0
        %v775 = vadd.f32 %v610, %v774
        %v776 = vpop.f32.mrf.mxu0
        %v777 = vpop.f32.mrf.mxu0
        %v778 = vadd.f32 %v610, %v777
        %v779 = vpop.f32.mrf.mxu0
        %780 = vmatprep.mubr.bf16.mxu0 %v568
        %781 = vmatmul.mubr.bf16.gmra.mxu0 %v567
        %v782 = vpop.f32.mrf.mxu0
        %v783 = vadd.f32 %v610, %v782
        %v784 = vpop.f32.mrf.mxu0
        %v785 = vpop.f32.mrf.mxu0
        %v786 = vadd.f32 %v610, %v785
        %v787 = vpop.f32.mrf.mxu0
        %788 = vmatprep.mubr.bf16.mxu0 %v570
        %789 = vmatmul.mubr.bf16.gmra.mxu0 %v569
        %v790 = vpop.f32.mrf.mxu0
        %v791 = vadd.f32 %v610, %v790
        %v792 = vpop.f32.mrf.mxu0
        %v793 = vpop.f32.mrf.mxu0
        %v794 = vadd.f32 %v610, %v793
        %v795 = vpop.f32.mrf.mxu0
        %796 = vmatprep.mubr.bf16.mxu0 %v572
        %797 = vmatmul.mubr.bf16.gmra.mxu0 %v571
        %v798 = vpop.f32.mrf.mxu0
        %v799 = vadd.f32 %v610, %v798
        %v800 = vpop.f32.mrf.mxu0
        %v801 = vpop.f32.mrf.mxu0
        %v802 = vadd.f32 %v610, %v801
        %v803 = vpop.f32.mrf.mxu0
        %804 = vdwg.mxu0
        %v805 = vadd.f32 %v743, %v296
        %v806 = vadd.f32 %v746, %v297
        %v807 = vadd.f32 %v751, %v298
        %v808 = vadd.f32 %v754, %v299
        %v809 = vadd.f32 %v759, %v300
        %v810 = vadd.f32 %v762, %v301
        %v811 = vadd.f32 %v767, %v302
        %v812 = vadd.f32 %v770, %v303
        %v813 = vadd.f32 %v775, %v304
        %v814 = vadd.f32 %v778, %v305
        %v815 = vadd.f32 %v783, %v306
        %v816 = vadd.f32 %v786, %v307
        %v817 = vadd.f32 %v791, %v308
        %v818 = vadd.f32 %v794, %v309
        %v819 = vadd.f32 %v799, %v310
        %v820 = vadd.f32 %v802, %v311
        %s821 = smul.u32 %s28, 128
        %s822 = scalar_lea.vmem %s287, %s821 [#allocation10]
        %823 = vst [vmem:[%s822] sm:$0xff] %v805
        %824 = vst [vmem:[%s822 + $0x8] sm:$0xff] %v806
        %825 = vst [vmem:[%s822 + $0x10] sm:$0xff] %v807
        %826 = vst [vmem:[%s822 + $0x18] sm:$0xff] %v808
        %827 = vst [vmem:[%s822 + $0x20] sm:$0xff] %v809
        %828 = vst [vmem:[%s822 + $0x28] sm:$0xff] %v810
        %829 = vst [vmem:[%s822 + $0x30] sm:$0xff] %v811
        %830 = vst [vmem:[%s822 + $0x38] sm:$0xff] %v812
        %831 = vst [vmem:[%s822 + $0x40] sm:$0xff] %v813
        %832 = vst [vmem:[%s822 + $0x48] sm:$0xff] %v814
        %833 = vst [vmem:[%s822 + $0x50] sm:$0xff] %v815
        %834 = vst [vmem:[%s822 + $0x58] sm:$0xff] %v816
        %835 = vst [vmem:[%s822 + $0x60] sm:$0xff] %v817
        %836 = vst [vmem:[%s822 + $0x68] sm:$0xff] %v818
        %837 = vst [vmem:[%s822 + $0x70] sm:$0xff] %v819
        %838 = vst [vmem:[%s822 + $0x78] sm:$0xff] %v820
        %v839 = vld [vmem:[#allocation2] sm:$0x1]
        %v840 = vadd.f32 %v805, %v806
        %v841 = vadd.f32 %v840, %v807
        %v842 = vadd.f32 %v841, %v808
        %v843 = vadd.f32 %v842, %v809
        %v844 = vadd.f32 %v843, %v810
        %v845 = vadd.f32 %v844, %v811
        %v846 = vadd.f32 %v845, %v812
        %v847 = vadd.f32 %v846, %v813
        %v848 = vadd.f32 %v847, %v814
        %v849 = vadd.f32 %v848, %v815
        %v850 = vadd.f32 %v849, %v816
        %v851 = vadd.f32 %v850, %v817
        %v852 = vadd.f32 %v851, %v818
        %v853 = vadd.f32 %v852, %v819
        %v854 = vadd.f32 %v853, %v820
        %v855 = vrot.slane %v854, 4
        %v856 = vadd.f32 %v854, %v855
        %v857 = vrot.slane %v856, 2
        %v858 = vadd.f32 %v856, %v857
        %v859 = vrot.slane %v858, 1
        %v860 = vadd.f32 %v858, %v859
        %v861 = vadd.f32 %v839, %v860
        %862 = vst [vmem:[#allocation2] sm:$0x1] %v861
        %v863 = vld [vmem:[#allocation3] sm:$0x1]
        %v864 = vmul.f32 %v805, %v805
        %v865 = vmul.f32 %v806, %v806
        %v866 = vmul.f32 %v807, %v807
        %v867 = vmul.f32 %v808, %v808
        %v868 = vmul.f32 %v809, %v809
        %v869 = vmul.f32 %v810, %v810
        %v870 = vmul.f32 %v811, %v811
        %v871 = vmul.f32 %v812, %v812
        %v872 = vmul.f32 %v813, %v813
        %v873 = vmul.f32 %v814, %v814
        %v874 = vmul.f32 %v815, %v815
        %v875 = vmul.f32 %v816, %v816
        %v876 = vmul.f32 %v817, %v817
        %v877 = vmul.f32 %v818, %v818
        %v878 = vmul.f32 %v819, %v819
        %v879 = vmul.f32 %v820, %v820
        %v880 = vadd.f32 %v864, %v865
        %v881 = vadd.f32 %v880, %v866
        %v882 = vadd.f32 %v881, %v867
        %v883 = vadd.f32 %v882, %v868
        %v884 = vadd.f32 %v883, %v869
        %v885 = vadd.f32 %v884, %v870
        %v886 = vadd.f32 %v885, %v871
        %v887 = vadd.f32 %v886, %v872
        %v888 = vadd.f32 %v887, %v873
        %v889 = vadd.f32 %v888, %v874
        %v890 = vadd.f32 %v889, %v875
        %v891 = vadd.f32 %v890, %v876
        %v892 = vadd.f32 %v891, %v877
        %v893 = vadd.f32 %v892, %v878
        %v894 = vadd.f32 %v893, %v879
        %v895 = vrot.slane %v894, 4
        %v896 = vadd.f32 %v894, %v895
        %v897 = vrot.slane %v896, 2
        %v898 = vadd.f32 %v896, %v897
        %v899 = vrot.slane %v898, 1
        %v900 = vadd.f32 %v898, %v899
        %v901 = vadd.f32 %v863, %v900
        %902 = vst [vmem:[#allocation3] sm:$0x1] %v901
        %p903 = scmp.eq.s32.totalorder %s28, 1
        // Predicated region
        $region57: #{tpu_custom_call.1} parent=39 // pred_check
          %p904 = pneg %p903
        $region58: #{tpu_custom_call.1} parent=39 // pred_check_branch
          %906 = sbr.rel (%p904) target = $region60
        $region59: #{tpu_custom_call.1} parent=39 // pred_region
          %v907 = vld [vmem:[#allocation2] sm:$0x1]
          %vm908 = vcmask 1040384
          %v909 = vsel %vm908, %v907, 0.0
          %910 = vadd.xlane.f32.xlu0 %v909
          %v911 = vpop.xlane.xlu0 %910
          %v912 = vrot.slane %v911, 4
          %v913 = vadd.f32 %v911, %v912
          %v914 = vrot.slane %v913, 2
          %v915 = vadd.f32 %v913, %v914
          %v916 = vrot.slane %v915, 1
          %v917 = vadd.f32 %v915, %v916
          %s918 = vtos %v917
          %s919 = smul.f32 %s918, 3.0517578e-05
          %v920 = vld [vmem:[#allocation3] sm:$0x1]
          %v921 = vsel %vm908, %v920, 0.0
          %922 = vadd.xlane.f32.xlu0 %v921
          %v923 = vpop.xlane.xlu0 %922
          %v924 = vrot.slane %v923, 4
          %v925 = vadd.f32 %v923, %v924
          %v926 = vrot.slane %v925, 2
          %v927 = vadd.f32 %v925, %v926
          %v928 = vrot.slane %v927, 1
          %v929 = vadd.f32 %v927, %v928
          %s930 = vtos %v929
          %s931 = smul.f32 %s930, 3.0517578e-05
          %s932 = smul.f32 %s919, %s919
          %s933 = ssub.f32 %s931, %s932
          %s934 = smax.f32 %s933, 0.0
          %s935 = sadd.f32 %s934, 1e-05
          %v936 = vstv %s935
          %v937 = vrsqrt.pop %v936
          %s938 = vtos %v937
          %v939 = vld [vmem:[%s287] sm:$0xff]
          %v940 = vld [vmem:[%s287 + $0x8] sm:$0xff]
          %v941 = vld [vmem:[%s287 + $0x10] sm:$0xff]
          %v942 = vld [vmem:[%s287 + $0x18] sm:$0xff]
          %v943 = vld [vmem:[%s287 + $0x20] sm:$0xff]
          %v944 = vld [vmem:[%s287 + $0x28] sm:$0xff]
          %v945 = vld [vmem:[%s287 + $0x30] sm:$0xff]
          %v946 = vld [vmem:[%s287 + $0x38] sm:$0xff]
          %v947 = vld [vmem:[%s287 + $0x40] sm:$0xff]
          %v948 = vld [vmem:[%s287 + $0x48] sm:$0xff]
          %v949 = vld [vmem:[%s287 + $0x50] sm:$0xff]
          %v950 = vld [vmem:[%s287 + $0x58] sm:$0xff]
          %v951 = vld [vmem:[%s287 + $0x60] sm:$0xff]
          %v952 = vld [vmem:[%s287 + $0x68] sm:$0xff]
          %v953 = vld [vmem:[%s287 + $0x70] sm:$0xff]
          %v954 = vld [vmem:[%s287 + $0x78] sm:$0xff]
          %v955 = vld [vmem:[%s287 + $0x80] sm:$0xff]
          %v956 = vld [vmem:[%s287 + $0x88] sm:$0xff]
          %v957 = vld [vmem:[%s287 + $0x90] sm:$0xff]
          %v958 = vld [vmem:[%s287 + $0x98] sm:$0xff]
          %v959 = vld [vmem:[%s287 + $0xa0] sm:$0xff]
          %v960 = vld [vmem:[%s287 + $0xa8] sm:$0xff]
          %v961 = vld [vmem:[%s287 + $0xb0] sm:$0xff]
          %v962 = vld [vmem:[%s287 + $0xb8] sm:$0xff]
          %v963 = vld [vmem:[%s287 + $0xc0] sm:$0xff]
          %v964 = vld [vmem:[%s287 + $0xc8] sm:$0xff]
          %v965 = vld [vmem:[%s287 + $0xd0] sm:$0xff]
          %v966 = vld [vmem:[%s287 + $0xd8] sm:$0xff]
          %v967 = vld [vmem:[%s287 + $0xe0] sm:$0xff]
          %v968 = vld [vmem:[%s287 + $0xe8] sm:$0xff]
          %v969 = vld [vmem:[%s287 + $0xf0] sm:$0xff]
          %v970 = vld [vmem:[%s287 + $0xf8] sm:$0xff]
          %v971 = vstv %s919
          %v972 = vsub.f32 %v939, %v971
          %v973 = vsub.f32 %v940, %v971
          %v974 = vsub.f32 %v941, %v971
          %v975 = vsub.f32 %v942, %v971
          %v976 = vsub.f32 %v943, %v971
          %v977 = vsub.f32 %v944, %v971
          %v978 = vsub.f32 %v945, %v971
          %v979 = vsub.f32 %v946, %v971
          %v980 = vsub.f32 %v947, %v971
          %v981 = vsub.f32 %v948, %v971
          %v982 = vsub.f32 %v949, %v971
          %v983 = vsub.f32 %v950, %v971
          %v984 = vsub.f32 %v951, %v971
          %v985 = vsub.f32 %v952, %v971
          %v986 = vsub.f32 %v953, %v971
          %v987 = vsub.f32 %v954, %v971
          %v988 = vsub.f32 %v955, %v971
          %v989 = vsub.f32 %v956, %v971
          %v990 = vsub.f32 %v957, %v971
          %v991 = vsub.f32 %v958, %v971
          %v992 = vsub.f32 %v959, %v971
          %v993 = vsub.f32 %v960, %v971
          %v994 = vsub.f32 %v961, %v971
          %v995 = vsub.f32 %v962, %v971
          %v996 = vsub.f32 %v963, %v971
          %v997 = vsub.f32 %v964, %v971
          %v998 = vsub.f32 %v965, %v971
          %v999 = vsub.f32 %v966, %v971
          %v1000 = vsub.f32 %v967, %v971
          %v1001 = vsub.f32 %v968, %v971
          %v1002 = vsub.f32 %v969, %v971
          %v1003 = vsub.f32 %v970, %v971
          %v1004 = vstv %s938
          %v1005 = vmul.f32 %v972, %v1004
          %v1006 = vmul.f32 %v973, %v1004
          %v1007 = vmul.f32 %v974, %v1004
          %v1008 = vmul.f32 %v975, %v1004
          %v1009 = vmul.f32 %v976, %v1004
          %v1010 = vmul.f32 %v977, %v1004
          %v1011 = vmul.f32 %v978, %v1004
          %v1012 = vmul.f32 %v979, %v1004
          %v1013 = vmul.f32 %v980, %v1004
          %v1014 = vmul.f32 %v981, %v1004
          %v1015 = vmul.f32 %v982, %v1004
          %v1016 = vmul.f32 %v983, %v1004
          %v1017 = vmul.f32 %v984, %v1004
          %v1018 = vmul.f32 %v985, %v1004
          %v1019 = vmul.f32 %v986, %v1004
          %v1020 = vmul.f32 %v987, %v1004
          %v1021 = vmul.f32 %v988, %v1004
          %v1022 = vmul.f32 %v989, %v1004
          %v1023 = vmul.f32 %v990, %v1004
          %v1024 = vmul.f32 %v991, %v1004
          %v1025 = vmul.f32 %v992, %v1004
          %v1026 = vmul.f32 %v993, %v1004
          %v1027 = vmul.f32 %v994, %v1004
          %v1028 = vmul.f32 %v995, %v1004
          %v1029 = vmul.f32 %v996, %v1004
          %v1030 = vmul.f32 %v997, %v1004
          %v1031 = vmul.f32 %v998, %v1004
          %v1032 = vmul.f32 %v999, %v1004
          %v1033 = vmul.f32 %v1000, %v1004
          %v1034 = vmul.f32 %v1001, %v1004
          %v1035 = vmul.f32 %v1002, %v1004
          %v1036 = vmul.f32 %v1003, %v1004
          %1037 = vst [vmem:[%s287] sm:$0xff] %v1005
          %1038 = vst [vmem:[%s287 + $0x8] sm:$0xff] %v1006
          %1039 = vst [vmem:[%s287 + $0x10] sm:$0xff] %v1007
          %1040 = vst [vmem:[%s287 + $0x18] sm:$0xff] %v1008
          %1041 = vst [vmem:[%s287 + $0x20] sm:$0xff] %v1009
          %1042 = vst [vmem:[%s287 + $0x28] sm:$0xff] %v1010
          %1043 = vst [vmem:[%s287 + $0x30] sm:$0xff] %v1011
          %1044 = vst [vmem:[%s287 + $0x38] sm:$0xff] %v1012
          %1045 = vst [vmem:[%s287 + $0x40] sm:$0xff] %v1013
          %1046 = vst [vmem:[%s287 + $0x48] sm:$0xff] %v1014
          %1047 = vst [vmem:[%s287 + $0x50] sm:$0xff] %v1015
          %1048 = vst [vmem:[%s287 + $0x58] sm:$0xff] %v1016
          %1049 = vst [vmem:[%s287 + $0x60] sm:$0xff] %v1017
          %1050 = vst [vmem:[%s287 + $0x68] sm:$0xff] %v1018
          %1051 = vst [vmem:[%s287 + $0x70] sm:$0xff] %v1019
          %1052 = vst [vmem:[%s287 + $0x78] sm:$0xff] %v1020
          %1053 = vst [vmem:[%s287 + $0x80] sm:$0xff] %v1021
          %1054 = vst [vmem:[%s287 + $0x88] sm:$0xff] %v1022
          %1055 = vst [vmem:[%s287 + $0x90] sm:$0xff] %v1023
          %1056 = vst [vmem:[%s287 + $0x98] sm:$0xff] %v1024
          %1057 = vst [vmem:[%s287 + $0xa0] sm:$0xff] %v1025
          %1058 = vst [vmem:[%s287 + $0xa8] sm:$0xff] %v1026
          %1059 = vst [vmem:[%s287 + $0xb0] sm:$0xff] %v1027
          %1060 = vst [vmem:[%s287 + $0xb8] sm:$0xff] %v1028
          %1061 = vst [vmem:[%s287 + $0xc0] sm:$0xff] %v1029
          %1062 = vst [vmem:[%s287 + $0xc8] sm:$0xff] %v1030
          %1063 = vst [vmem:[%s287 + $0xd0] sm:$0xff] %v1031
          %1064 = vst [vmem:[%s287 + $0xd8] sm:$0xff] %v1032
          %1065 = vst [vmem:[%s287 + $0xe0] sm:$0xff] %v1033
          %1066 = vst [vmem:[%s287 + $0xe8] sm:$0xff] %v1034
          %1067 = vst [vmem:[%s287 + $0xf0] sm:$0xff] %v1035
          %1068 = vst [vmem:[%s287 + $0xf8] sm:$0xff] %v1036
        $region60: #{tpu_custom_call.1} parent=39 // pred_fallthru
          _
        %s1069 = sand.u32 %s155, 1
        %s1070 = scalar_lea.sflag [#allocation6], %s1069
        %s1071 = sand.u32 %s155, 1
        %s1072 = smul.addr %s1071, 256
        %s1073 = scalar_lea.vmem [#allocation10], %s1072
        // Predicated region
        $region61: #{tpu_custom_call.1} parent=39 // pred_check
          %p1074 = pneg %p165
        $region62: #{tpu_custom_call.1} parent=39 // pred_check_branch
          %1076 = sbr.rel (%p1074) target = $region64
        $region63: #{tpu_custom_call.1} parent=39 // pred_region
          %s1078 = ssub.s32 4096, 4096
          %1079 = vsyncadd %s1070, %s1078
          %s1080 = smul.addr %s27, 32
          %s1081 = smul.addr %s1080, 128
          %s1082 = scalar_lea.hbm %s5, %s1081
          %s1083 = sshll.u32 %s1073, 4
          %s1084 = int_to_ptr.vmem [resolvable:$true] %s1083
          %1089 = dma.vmem_to_hbm [thread:$0]  %s1084, 4096, %s1082, %s1070, 128, 128, 8
        $region64: #{tpu_custom_call.1} parent=39 // pred_fallthru
          _
      $region40: #{tpu_custom_call.1} parent=5 // pred_fallthru
        _
      %p1090 = scmp.le.s32.totalorder 2, %s18
      // Predicated region
      $region65: #{tpu_custom_call.1} parent=5 // pred_check
        %p1091 = pneg %p1090
      $region66: #{tpu_custom_call.1} parent=5 // pred_check_branch
        %1093 = sbr.rel (%p1091) target = $region68
      $region67: #{tpu_custom_call.1} parent=5 // pred_region
        %s1094 = ssub.s32 %s18, 2
        // Predicated region
        $region69: #{tpu_custom_call.1} parent=67 // pred_check
          %p1095 = pneg %p171
        $region70: #{tpu_custom_call.1} parent=67 // pred_check_branch
          %1097 = sbr.rel (%p1095) target = $region72
        $region71: #{tpu_custom_call.1} parent=67 // pred_region
          %s1098 = sand.u32 %s156, 1
          %s1099 = scalar_lea.sflag [#allocation6], %s1098
          %s1100 = sand.u32 %s156, 1
          %s1101 = smul.addr %s1100, 256
          %s1102 = scalar_lea.vmem [#allocation10], %s1101
          %1103 = dma.done %s1099, 4096
        $region72: #{tpu_custom_call.1} parent=67 // pred_fallthru
          _
      $region68: #{tpu_custom_call.1} parent=5 // pred_fallthru
        _
    $region6: #{tpu_custom_call.1} parent=1 // loop_footer
      %s22 = sadd.s32 1, %s18
    $region7: #{tpu_custom_call.1} parent=1 // loop_footer_branch
      %17 = sbr.rel target = $region3
    $region8: #{tpu_custom_call.1} parent=1 // loop_exit
      _
    %1104 = vsyncpa [#allocation5], 1
    %s1105 = scalar_lea.sflag [#allocation5], 1
    %1106 = vsyncpa %s1105, 1
    %1107 = vsyncpa [#allocation8], 1
    %1108 = vsyncpa [#allocation6], 1
    %s1109 = scalar_lea.sflag [#allocation6], 1
    %1110 = vsyncpa %s1109, 1

</llo_original>
